<compile_context>
chip_gen: v7x
topology: tpu7x:2x2x1
jax: 0.10.0
libtpu: 0.0.40
codegen_flags: <defaults>
</compile_context>

<pallas_src>
import functools

import jax
import jax.numpy as jnp
from jax import lax
from jax.experimental import pallas as pl
from jax.experimental.pallas import tpu as pltpu

# TODO(synk): the pretrained ESM transformer stack (self-attention layers,
# rotary embeddings, final LayerNorm) has no Pallas equivalent without its
# checkpoint; only its token-embedding front-end + scale_layer are reproduced.


def _round_up(x, m):
    return ((x + m - 1) // m) * m


def esm_embed_kernel(tok_ref, tbl_ref, o_ref):
    # tok_ref: (TM, 1) int32 token ids for this row block
    # tbl_ref: (VOCAB_pad, TN) bf16 fused (embedding @ W + b) table tile
    # o_ref  : (TM, TN) output tile (lane-dense, unmasked stores)
    ids = tok_ref[...]                                        # (TM, 1)
    tm = ids.shape[0]
    vocab_pad = tbl_ref.shape[0]
    iota = lax.broadcasted_iota(jnp.int32, (tm, vocab_pad), 1)
    # 0/1 is exact in bf16, so bf16 operands + f32 accumulate == exact gather
    # of the bf16 fused table (native MXU path instead of emulated f32xf32).
    onehot = (ids == iota).astype(tbl_ref.dtype)              # (TM, VOCAB_pad)
    acc = jnp.dot(onehot, tbl_ref[...],
                  preferred_element_type=jnp.float32)         # (TM, TN) f32
    o_ref[...] = acc.astype(o_ref.dtype)


def make_fused_table(emb_table, w=None, b=None, *, table_dtype=jnp.bfloat16):
    """Init-time: fuse scale_layer into the embedding table and pad it.

    Returns (fused_pad, d_out): fused_pad is (VOCAB_pad, D_OUT_pad) in
    `table_dtype`, zero padded to multiples of 128 on both axes.
    NOTE: any Inf/NaN in the fused table would contaminate every output row
    through the one-hot matmul (0 * Inf = NaN), unlike a true gather.
    """
    vocab, d_in = emb_table.shape
    if w is not None:
        d_out = w.shape[1]
        fused = jnp.dot(emb_table.astype(jnp.float32), w.astype(jnp.float32))
        if b is not None:
            fused = fused + b.reshape(1, d_out).astype(jnp.float32)
    else:                                  # scale_layer == Identity
        d_out = d_in
        fused = emb_table.astype(jnp.float32)
    vocab_pad = _round_up(vocab, 128)
    d_out_pad = _round_up(d_out, 128)
    fused_pad = jnp.pad(fused, ((0, vocab_pad - vocab), (0, d_out_pad - d_out)))
    return fused_pad.astype(table_dtype), d_out


@functools.partial(jax.jit,
                   static_argnames=("d_out", "tm_max", "tn_max", "out_dtype"))
def esm_embed_forward(tokens, fused_table_pad, *, d_out,
                      tm_max=512, tn_max=1024, out_dtype=jnp.float32):
    """tokens: (B, 1, L) int32.  Returns (B, L, d_out) in out_dtype.

    fused_table_pad is the precomputed (init-time) padded fused table from
    make_fused_table.  Out-of-range ids (>= vocab, incl. the row-padding
    sentinel) hit zero rows and produce zeros (unlike torch.nn.Embedding).
    """
    B, one, L = tokens.shape
    assert one == 1
    vocab_pad, d_out_pad = fused_table_pad.shape

    # --- adaptive row tile: no huge padding for small M, >=2 grid steps when
    # possible (both v7x TensorCores get work); 16-row alignment keeps the
    # bf16 one-hot and bf16 outputs on native (16,128) tiles. ---------------
    M = B * L
    tm = min(tm_max, max(16, _round_up(pl.cdiv(M, 2), 16)))
    M_pad = _round_up(M, tm)
    n_i = M_pad // tm

    # --- lane tile: bound the output VMEM footprint regardless of d_out ----
    if d_out_pad <= tn_max:
        tn = d_out_pad
    else:
        tn = 128
        for cand in range(tn_max // 128, 0, -1):
            c = cand * 128
            if d_out_pad % c == 0:
                tn = c
                break
    n_j = d_out_pad // tn

    # --- flatten + pad tokens (sentinel = vocab_pad matches no table row) ---
    tok_flat = tokens.reshape(M).astype(jnp.int32)
    tok_flat = jnp.pad(tok_flat, (0, M_pad - M), constant_values=vocab_pad)
    tok_flat = tok_flat.reshape(M_pad, 1)

    # Constant table block -> single buffer; if tiled over d_out, keep double
    # buffering so the j-boundary re-fetch is hidden.
    table_bufs = 1 if n_j == 1 else 2
    tbl_itemsize = jnp.dtype(fused_table_pad.dtype).itemsize
    out_itemsize = jnp.dtype(out_dtype).itemsize

    vmem_need = (2 * tm * 4                                    # token tiles
                 + table_bufs * vocab_pad * tn * tbl_itemsize  # table tile(s)
                 + 2 * tm * tn * out_itemsize                  # output tiles
                 + tm * vocab_pad * 4)                         # one-hot temp
    vmem_limit = min(max(int(vmem_need * 1.5) + (4 << 20), 32 << 20), 64 << 20)

    grid_spec = pltpu.PrefetchScalarGridSpec(
        num_scalar_prefetch=0,
        grid=(n_j, n_i),          # i innermost: table block constant across i
        in_specs=[
            pl.BlockSpec((tm, 1), lambda j, i: (i, 0)),              # token ids
            pl.BlockSpec((vocab_pad, tn), lambda j, i: (0, j),       # fused tbl
                         pipeline_mode=pl.Buffered(table_bufs)),
        ],
        out_specs=pl.BlockSpec((tm, tn), lambda j, i: (i, j)),
    )

    out_pad = pl.pallas_call(
        esm_embed_kernel,
        out_shape=jax.ShapeDtypeStruct((M_pad, d_out_pad), out_dtype),
        grid_spec=grid_spec,
        compiler_params=pltpu.CompilerParams(
            dimension_semantics=("parallel", "parallel"),  # shards across TCs
            vmem_limit_bytes=vmem_limit),
    )(tok_flat, fused_table_pad)

    return out_pad[:M, :d_out].reshape(B, L, d_out)


if __name__ == "__main__":
    # Small synthetic config: ESM-style alphabet of 33 tokens,
    # in_features=64 (stand-in embed_dim), out_features=32 -> Linear applies.
    B, L = 2, 16
    VOCAB, D_IN, D_OUT = 33, 64, 32

    key = jax.random.PRNGKey(0)
    k_tok, k_emb, k_w, k_b = jax.random.split(key, 4)

    tokens = jax.random.randint(k_tok, (B, 1, L), 0, VOCAB, dtype=jnp.int32)
    emb_table = jax.random.normal(k_emb, (VOCAB, D_IN), dtype=jnp.float32) * 0.02
    w = jax.random.normal(k_w, (D_IN, D_OUT), dtype=jnp.float32) * (D_IN ** -0.5)
    b = jax.random.normal(k_b, (1, D_OUT), dtype=jnp.float32) * 0.01

    # Fused table built ONCE (init-time), bf16 for the native MXU path.
    fused_pad, d_out = make_fused_table(emb_table, w, b,
                                        table_dtype=jnp.bfloat16)

    # f32 output (matches the module's output dtype).
    out = esm_embed_forward(tokens, fused_pad, d_out=d_out)
    out = jax.block_until_ready(out)

    # bf16-output variant (halves HBM writeback in the memory-bound regime).
    out_bf16 = esm_embed_forward(tokens, fused_pad, d_out=d_out,
                                 out_dtype=jnp.bfloat16)
    out_bf16 = jax.block_until_ready(out_bf16)

    # Exact reference for the bf16-table path: gather of the bf16 fused table.
    ids = tokens.reshape(B * L)
    fused_exact = fused_pad[:VOCAB, :D_OUT].astype(jnp.float32)
    ref_exact = jnp.take(fused_exact, ids, axis=0).reshape(B, L, D_OUT)

    # Full-f32 reference (embedding lookup then Linear); differs only by the
    # bf16 rounding of the fused table.
    ref_f32 = jnp.take(emb_table, ids, axis=0).reshape(B, L, D_IN) @ w + b

    assert out.shape == (B, L, D_OUT)
    assert jnp.allclose(out, ref_exact, atol=1e-6), \
        "mismatch vs exact bf16-table reference"
    assert jnp.allclose(out, ref_f32, atol=2e-2, rtol=2e-2), \
        "mismatch vs f32 reference"
    assert jnp.allclose(out_bf16.astype(jnp.float32), ref_exact, atol=1e-6), \
        "bf16-output mismatch vs exact bf16-table reference"
    print("KERNEL_OK")
</pallas_src>

<mosaic_0001>
module attributes {stable_mosaic.version = 11 : i64} {
  func.func @esm_embed_kernel(%arg0: i32, %arg1: i32, %arg2: memref<16x1xi32, #tpu.memory_space<vmem>>, %arg3: memref<128x128xbf16, #tpu.memory_space<vmem>>, %arg4: memref<16x128xf32, #tpu.memory_space<vmem>>) attributes {dimension_semantics = [#tpu.dimension_semantics<parallel>, #tpu.dimension_semantics<parallel>], iteration_bounds = array<i64: 1, 2>, scalar_prefetch = 0 : i64, scratch_operands = 0 : i64, tpu.core_type = #tpu.core_type<tc>, window_params = [{transform_indices = @transform_0, window_bounds = array<i64: 16, 1>}, {pipeline_mode = #tpu.pipeline_mode<synchronous>, transform_indices = @transform_1, window_bounds = array<i64: 128, 128>}, {transform_indices = @transform_2, window_bounds = array<i64: 16, 128>}]} {
    %c0 = arith.constant 0 : index
    %c0_0 = arith.constant 0 : index
    %0 = vector.load %arg2[%c0, %c0_0] : memref<16x1xi32, #tpu.memory_space<vmem>>, vector<16x1xi32>
    %1 = tpu.iota {dimensions = array<i32: 1>} : vector<16x128xi32>
    %2 = vector.broadcast %0 : vector<16x1xi32> to vector<16x128xi32>
    %3 = arith.cmpi eq, %2, %1 : vector<16x128xi32>
    %4 = arith.extui %3 : vector<16x128xi1> to vector<16x128xi32>
    %5 = arith.sitofp %4 : vector<16x128xi32> to vector<16x128xf32>
    %6 = arith.truncf %5 : vector<16x128xf32> to vector<16x128xbf16>
    %c0_1 = arith.constant 0 : index
    %c0_2 = arith.constant 0 : index
    %7 = vector.load %arg3[%c0_1, %c0_2] : memref<128x128xbf16, #tpu.memory_space<vmem>>, vector<128x128xbf16>
    %cst = arith.constant dense<0.000000e+00> : vector<16x128xf32>
    %8 = tpu.matmul %6, %7, %cst {dimension_numbers = #tpu.dot_dimension_numbers<[1], [0], [0], [1], [0, 0, 1, 1], [], []>} : vector<16x128xbf16>, vector<128x128xbf16>, vector<16x128xf32> -> vector<16x128xf32>
    %c0_3 = arith.constant 0 : index
    %c0_4 = arith.constant 0 : index
    %9 = vector.load %arg4[%c0_3, %c0_4] : memref<16x128xf32, #tpu.memory_space<vmem>>, vector<16x128xf32>
    tpu.vector_store %arg4[%c0_3, %c0_4], %8 {strides = array<i32>} : memref<16x128xf32, #tpu.memory_space<vmem>>, vector<16x128xf32>,
    return
  }
  func.func @transform_0(%arg0: i32, %arg1: i32) -> (i32, i32) {
    %c0_i32 = arith.constant 0 : i32
    %c0_i32_0 = arith.constant 0 : i32
    return %arg1, %c0_i32 : i32, i32
  }
  func.func @transform_1(%arg0: i32, %arg1: i32) -> (i32, i32) {
    %c0_i32 = arith.constant 0 : i32
    %c0_i32_0 = arith.constant 0 : i32
    return %c0_i32, %arg0 : i32, i32
  }
  func.func @transform_2(%arg0: i32, %arg1: i32) -> (i32, i32) {
    %c0_i32 = arith.constant 0 : i32
    return %arg1, %arg0 : i32, i32
  }
}

</mosaic_0001>

<llo_original>
// kernel: esm_embed_forward.1
$region0: #{esm_embed_forward.1}
  #allocation0 [shape = 'u32[]', space=smem, size = 0x4, offset = 0x4, fixed_abs, tag = 'smem constant byte address 0x4 - core index']
  #allocation1 [shape = 'u32[144,128]{1,0:T(1,128)}', space=vmem, size = 0x12000, scoped, tag = 'internal scratch']
  %s0 = inlined_call_operand.vmem [shape: s32[32,1], index: 0, kind: input, shape index: {}]
  %s1 = inlined_call_operand.hbm [shape: bf16[128,128], index: 1, kind: input, shape index: {}]
  %s2 = inlined_call_operand.hbm [shape: f32[32,128], index: 2, kind: output, shape index: {}]
  %s3 = sld [smem:[#allocation0]]
  $region45: #{esm_embed_forward.1} parent=0
    _
  %s5 = ssub.s32 1, %s3
  %s6 = scalar_select 0, %s5, %s3
  $region1: #{esm_embed_forward.1} parent=0
    #allocation2 [shape = 'u8[32768]{0}', space=vmem, size = 0x8000, scoped, tag = 'input window, operand 1, single buffered']
    #allocation3 [shape = 's32[2]{0}', space=sflag, size = 0x8, scoped, tag = 'scoped memory for esm_embed_forward.1']
    #allocation4 [shape = 's32[2]{0}', space=sflag, size = 0x8, scoped, tag = 'scoped memory for esm_embed_forward.1']
    #allocation5 [shape = 'u8[16384]{0}', space=vmem, size = 0x4000, scoped, tag = 'output window, operand 0']
    %7 = vsyncpa [#allocation3], 0
    %8 = vsyncpa [#allocation4], 0
    %s9 = scalar_lea.sflag [#allocation4], 1
    %10 = vsyncpa %s9, 0
    loop: start=0, step=1, limit=4
    $region2: #{esm_embed_forward.1} parent=1 // loop_pre_header
      _
    $region3: #{esm_embed_forward.1} parent=1 // loop_header
      %s12 = sphi 0, %s16
      %p13 = scmp.ge.s32.totalorder %s12, 4
      %s19 = sphi 0, %s31
      %s20 = sphi 0, %s27
      %s21 = sphi 0, %s19
      %s22 = sphi 0, %s20
      %s23 = sphi 0, %s21
      %s24 = sphi 0, %s22
      %s34 = sphi 0, %s36
      %s37 = sphi 0, %s34
      %s38 = sphi 0, %s37
      %s54 = sphi 0, %s38
      %s60 = sphi 0, %s62
      %s63 = sphi 0, %s60
      %s64 = sphi 0, %s63
      %s80 = sphi 0, %s64
      %s88 = sphi 0, %s90
      %s91 = sphi 0, %s88
      %s92 = sphi 0, %s91
      %s108 = sphi 0, %s92
    $region4: #{esm_embed_forward.1} parent=1 // loop_header_branch
      %15 = sbr.rel (%p13) target = $region8
    $region5: #{esm_embed_forward.1} parent=1 // loop_body
      %s17 = ssub.s32 %s12, 1
      %s18 = ssub.s32 %s12, 2
      %s25 = sadd.s32 1, %s20
      %p26 = scmp.ge.s32.totalorder %s25, 2
      %s27 = scalar_select %p26, 0, %s25
      %s28 = sadd.s32 1, %s19
      %s29 = scalar_select %p26, %s28, %s19
      %p30 = scmp.ge.s32.totalorder %s29, 1
      %s31 = scalar_select %p30, 0, %s29
      %s32 = ssub.s32 %s20, %s27
      %p33 = scmp.eq.s32.totalorder %s32, 0
      %s35 = sadd.s32 %s34, 1
      %s36 = scalar_select %p33, %s34, %s35
      %p39 = pneg %p33
      %p40 = scmp.eq.s32.totalorder %s12, 1
      %p41 = por %p39, %p40
      %p42 = scmp.ne.s32.totalorder %s34, %s37
      %p43 = scmp.eq.s32.totalorder %s12, 0
      %p44 = por %p42, %p43
      %p45 = scmp.ne.s32.totalorder %s34, %s37
      %p46 = scmp.eq.s32.totalorder %s17, 1
      %p47 = por %p45, %p46
      %p48 = scmp.ne.s32.totalorder %s37, %s38
      %p49 = scmp.eq.s32.totalorder %s17, 0
      %p50 = por %p48, %p49
      %p51 = scmp.ne.s32.totalorder %s37, %s38
      %p52 = scmp.eq.s32.totalorder %s18, 1
      %p53 = por %p51, %p52
      %p55 = scmp.ne.s32.totalorder %s38, %s54
      %p56 = scmp.eq.s32.totalorder %s18, 0
      %p57 = por %p55, %p56
      %s58 = ssub.s32 %s19, %s31
      %p59 = scmp.eq.s32.totalorder %s58, 0
      %s61 = sadd.s32 %s60, 1
      %s62 = scalar_select %p59, %s60, %s61
      %p65 = pneg %p59
      %p66 = scmp.eq.s32.totalorder %s12, 1
      %p67 = por %p65, %p66
      %p68 = scmp.ne.s32.totalorder %s60, %s63
      %p69 = scmp.eq.s32.totalorder %s12, 0
      %p70 = por %p68, %p69
      %p71 = scmp.ne.s32.totalorder %s60, %s63
      %p72 = scmp.eq.s32.totalorder %s17, 1
      %p73 = por %p71, %p72
      %p74 = scmp.ne.s32.totalorder %s63, %s64
      %p75 = scmp.eq.s32.totalorder %s17, 0
      %p76 = por %p74, %p75
      %p77 = scmp.ne.s32.totalorder %s63, %s64
      %p78 = scmp.eq.s32.totalorder %s18, 1
      %p79 = por %p77, %p78
      %p81 = scmp.ne.s32.totalorder %s64, %s80
      %p82 = scmp.eq.s32.totalorder %s18, 0
      %p83 = por %p81, %p82
      %s84 = ssub.s32 %s20, %s27
      %s85 = ssub.s32 %s19, %s31
      %s86 = sor.u32 %s84, %s85
      %p87 = scmp.eq.s32.totalorder %s86, 0
      %s89 = sadd.s32 %s88, 1
      %s90 = scalar_select %p87, %s88, %s89
      %p93 = pneg %p87
      %p94 = scmp.eq.s32.totalorder %s12, 1
      %p95 = por %p93, %p94
      %p96 = scmp.ne.s32.totalorder %s88, %s91
      %p97 = scmp.eq.s32.totalorder %s12, 0
      %p98 = por %p96, %p97
      %p99 = scmp.ne.s32.totalorder %s88, %s91
      %p100 = scmp.eq.s32.totalorder %s17, 1
      %p101 = por %p99, %p100
      %p102 = scmp.ne.s32.totalorder %s91, %s92
      %p103 = scmp.eq.s32.totalorder %s17, 0
      %p104 = por %p102, %p103
      %p105 = scmp.ne.s32.totalorder %s91, %s92
      %p106 = scmp.eq.s32.totalorder %s18, 1
      %p107 = por %p105, %p106
      %p109 = scmp.ne.s32.totalorder %s92, %s108
      %p110 = scmp.eq.s32.totalorder %s18, 0
      %p111 = por %p109, %p110
      %p112 = scmp.le.s32.totalorder 1, %s12
      %p113 = scmp.lt.s32.totalorder %s12, 3
      %p114 = pnand %p112, %p113
      %p115 = pneg %p114
      // Predicated region
      $region9: #{esm_embed_forward.1} parent=5 // pred_check
        _
      $region10: #{esm_embed_forward.1} parent=5 // pred_check_branch
        %117 = sbr.rel (%p114) target = $region12
      $region11: #{esm_embed_forward.1} parent=5 // pred_region
        %s118 = ssub.s32 %s12, 1
        // Predicated region
        $region13: #{esm_embed_forward.1} parent=11 // pred_check
          %p119 = pneg %p76
        $region14: #{esm_embed_forward.1} parent=11 // pred_check_branch
          %121 = sbr.rel (%p119) target = $region16
        $region15: #{esm_embed_forward.1} parent=11 // pred_region
          %s123 = ssub.s32 1024, 1024
          %124 = vsyncadd [#allocation3], %s123
          %s125 = smul.addr %s21, 64
          %s126 = scalar_lea.hbm %s1, %s125
          %s127 = sshll.u32 [#allocation2], 4
          %s128 = int_to_ptr.vmem [resolvable:$true] %s127
          %133 = dma.hbm_to_vmem [thread:$0]  %s126, 1024, %s128, [#allocation3], 64, 64, 4
        $region16: #{esm_embed_forward.1} parent=11 // pred_fallthru
          _
      $region12: #{esm_embed_forward.1} parent=5 // pred_fallthru
        _
      %p134 = scmp.lt.s32.totalorder %s12, 2
      // Predicated region
      $region17: #{esm_embed_forward.1} parent=5 // pred_check
        %p135 = pneg %p134
      $region18: #{esm_embed_forward.1} parent=5 // pred_check_branch
        %137 = sbr.rel (%p135) target = $region20
      $region19: #{esm_embed_forward.1} parent=5 // pred_region
        // Predicated region
        $region21: #{esm_embed_forward.1} parent=19 // pred_check
          %p138 = pneg %p44
        $region22: #{esm_embed_forward.1} parent=19 // pred_check_branch
          %140 = sbr.rel (%p138) target = $region24
        $region23: #{esm_embed_forward.1} parent=19 // pred_region
          %s141 = smul.u32 2, %s20
          %p142 = scmp.lt.s32.totalorder %s141, 3
          %s143 = scalar_select %p142, %s141, 3
          %s144 = smul.addr %s143, 8
          %s145 = scalar_lea.vmem %s0, %s144
          %s146 = smul.u32 2, %s20
        $region24: #{esm_embed_forward.1} parent=19 // pred_fallthru
          _
      $region20: #{esm_embed_forward.1} parent=5 // pred_fallthru
        _
      %p147 = scmp.le.s32.totalorder 1, %s12
      %p148 = scmp.lt.s32.totalorder %s12, 3
      %p149 = pnand %p147, %p148
      %p150 = pneg %p149
      // Predicated region
      $region25: #{esm_embed_forward.1} parent=5 // pred_check
        _
      $region26: #{esm_embed_forward.1} parent=5 // pred_check_branch
        %152 = sbr.rel (%p149) target = $region28
      $region27: #{esm_embed_forward.1} parent=5 // pred_region
        %s153 = ssub.s32 %s12, 1
        // Predicated region
        $region29: #{esm_embed_forward.1} parent=27 // pred_check
          %p154 = pneg %p76
        $region30: #{esm_embed_forward.1} parent=27 // pred_check_branch
          %156 = sbr.rel (%p154) target = $region32
        $region31: #{esm_embed_forward.1} parent=27 // pred_region
          %157 = dma.done [#allocation3], 1024
        $region32: #{esm_embed_forward.1} parent=27 // pred_fallthru
          _
        %s158 = smul.u32 2, %s22
        %p159 = scmp.lt.s32.totalorder %s158, 3
        %s160 = scalar_select %p159, %s158, 3
        %s161 = smul.addr %s160, 8
        %s162 = scalar_lea.vmem %s0, %s161
        %p163 = pneg %p50
        %p164 = pneg %p47
        %p165 = pneg %p76
        %p166 = pneg %p73
        %p167 = pneg %p104
        %p168 = pneg %p101
        %s169 = sand.u32 %s91, 1
        %s170 = scalar_lea.sflag [#allocation4], %s169
        %s171 = sand.u32 %s91, 1
        %s172 = smul.addr %s171, 16
        %s173 = scalar_lea.vmem [#allocation5], %s172
        %s174 = smul.u32 2, %s22
        %p175 = scmp.lt.s32.totalorder %s174, 3
        %s176 = scalar_select %p175, %s174, 3
        %s177 = smul.addr %s176, 8
        %s178 = scalar_lea.vmem %s0, %s177
        %s179 = smul.u32 2, %s22
        %s180 = smul.u32 2, %s22
        %v182 = vld [vmem:[%s178] sm:$0xff]
        %v183 = vld [vmem:[%s178 + $0x8] sm:$0xff]
        %v184 = vlaneseq
        %v185 = vand.u32 %v184, 127
        %186 = vset.pattern.permute.xlu0 0
        %187 = vperm.xlu0 %186, %v182
        %v188 = vpop.permute.xlu0 %187
        %189 = vset.pattern.permute.xlu0 0
        %190 = vperm.xlu0 %189, %v183
        %v191 = vpop.permute.xlu0 %190
        %vm192 = vcmp.eq.s32.totalorder %v188, %v185
        %vm193 = vcmp.eq.s32.totalorder %v191, %v185
        %v194 = vsel %vm192, 1, 0
        %v195 = vsel %vm193, 1, 0
        %v196 = vcvt.s32.f32 %v194
        %v197 = vcvt.s32.f32 %v195
        %v198 = vpack.c.bf16 %v197, %v196
        %v199 = vld [vmem:[#allocation2] sm:$0xf]
        %v200 = vld [vmem:[#allocation2 + $0x4] sm:$0xf]
        %v201 = vld [vmem:[#allocation2 + $0x8] sm:$0xf]
        %v202 = vld [vmem:[#allocation2 + $0xc] sm:$0xf]
        %v203 = vld [vmem:[#allocation2 + $0x10] sm:$0xf]
        %v204 = vld [vmem:[#allocation2 + $0x14] sm:$0xf]
        %v205 = vld [vmem:[#allocation2 + $0x18] sm:$0xf]
        %v206 = vld [vmem:[#allocation2 + $0x1c] sm:$0xf]
        %v207 = vld [vmem:[#allocation2 + $0x20] sm:$0xf]
        %v208 = vld [vmem:[#allocation2 + $0x24] sm:$0xf]
        %v209 = vld [vmem:[#allocation2 + $0x28] sm:$0xf]
        %v210 = vld [vmem:[#allocation2 + $0x2c] sm:$0xf]
        %v211 = vld [vmem:[#allocation2 + $0x30] sm:$0xf]
        %v212 = vld [vmem:[#allocation2 + $0x34] sm:$0xf]
        %v213 = vld [vmem:[#allocation2 + $0x38] sm:$0xf]
        %v214 = vld [vmem:[#allocation2 + $0x3c] sm:$0xf]
        %v231 = vunpack.c.l.b16 %v199
        %v232 = vunpack.c.l.b16 %v200
        %v233 = vunpack.c.l.b16 %v201
        %v234 = vunpack.c.l.b16 %v202
        %v235 = vunpack.c.l.b16 %v203
        %v236 = vunpack.c.l.b16 %v204
        %v237 = vunpack.c.l.b16 %v205
        %v238 = vunpack.c.l.b16 %v206
        %v239 = vunpack.c.l.b16 %v207
        %v240 = vunpack.c.l.b16 %v208
        %v241 = vunpack.c.l.b16 %v209
        %v242 = vunpack.c.l.b16 %v210
        %v243 = vunpack.c.l.b16 %v211
        %v244 = vunpack.c.l.b16 %v212
        %v245 = vunpack.c.l.b16 %v213
        %v246 = vunpack.c.l.b16 %v214
        %v247 = vpack.c.b16 %v232, %v231
        %v248 = vpack.c.b16 %v234, %v233
        %v249 = vpack.c.b16 %v236, %v235
        %v250 = vpack.c.b16 %v238, %v237
        %v251 = vpack.c.b16 %v240, %v239
        %v252 = vpack.c.b16 %v242, %v241
        %v253 = vpack.c.b16 %v244, %v243
        %v254 = vpack.c.b16 %v246, %v245
        %263 = vmatprep.subr.bf16.mxu0 0
        %264 = vmatpush1.bf16.msra.mxu0 %v247
        %265 = vmatprep.subr.bf16.mxu0 0
        %266 = vmatpush1.bf16.msra.mxu0 %v248
        %267 = vmatprep.subr.bf16.mxu0 0
        %268 = vmatpush1.bf16.msra.mxu0 %v249
        %269 = vmatprep.subr.bf16.mxu0 0
        %270 = vmatpush1.bf16.msra.mxu0 %v250
        %271 = vmatprep.subr.bf16.mxu0 0
        %272 = vmatpush1.bf16.msra.mxu0 %v251
        %273 = vmatprep.subr.bf16.mxu0 0
        %274 = vmatpush1.bf16.msra.mxu0 %v252
        %275 = vmatprep.subr.bf16.mxu0 0
        %276 = vmatpush1.bf16.msra.mxu0 %v253
        %277 = vmatprep.subr.bf16.mxu0 0
        %278 = vmatpush1.bf16.msra.mxu0 %v254
        %279 = vmatprep.subr.bf16.mxu0 0
        %280 = vmatpush1.bf16.msra.mxu0 0
        %281 = vmatprep.subr.bf16.mxu0 0
        %282 = vmatpush1.bf16.msra.mxu0 0
        %283 = vmatprep.subr.bf16.mxu0 0
        %284 = vmatpush1.bf16.msra.mxu0 0
        %285 = vmatprep.subr.bf16.mxu0 0
        %286 = vmatpush1.bf16.msra.mxu0 0
        %287 = vmatprep.subr.bf16.mxu0 0
        %288 = vmatpush1.bf16.msra.mxu0 0
        %289 = vmatprep.subr.bf16.mxu0 0
        %290 = vmatpush1.bf16.msra.mxu0 0
        %291 = vmatprep.subr.bf16.mxu0 0
        %292 = vmatpush1.bf16.msra.mxu0 0
        %293 = vmatprep.subr.bf16.mxu0 0
        %294 = vmatpush1.bf16.msra.mxu0 0
        %295 = vmatprep.mubr.bf16.mxu0 0
        %296 = vmatmul.mubr.bf16.gmra.mrb[0].mxu0 %v198
        %v297 = vpop.f32.mrb[0].mxu0
        %v298 = vadd.f32 0.0, %v297
        %v299 = vpop.f32.mrb[0].mxu0
        %v300 = vpop.f32.mrb[0].mxu0
        %v301 = vadd.f32 0.0, %v300
        %v302 = vpop.f32.mrb[0].mxu0
        %303 = vdwg.mxu0
        %304 = vst [vmem:[%s173] sm:$0xff] %v298
        %305 = vst [vmem:[%s173 + $0x8] sm:$0xff] %v301
        %s306 = sand.u32 %s91, 1
        %s307 = scalar_lea.sflag [#allocation4], %s306
        %s308 = sand.u32 %s91, 1
        %s309 = smul.addr %s308, 16
        %s310 = scalar_lea.vmem [#allocation5], %s309
        // Predicated region
        $region33: #{esm_embed_forward.1} parent=27 // pred_check
          %p311 = pneg %p101
        $region34: #{esm_embed_forward.1} parent=27 // pred_check_branch
          %313 = sbr.rel (%p311) target = $region36
        $region35: #{esm_embed_forward.1} parent=27 // pred_region
          %s314 = smul.u32 2, %s22
          %s316 = ssub.s32 256, 256
          %317 = vsyncadd %s307, %s316
          %s318 = sadd.s32 %s21, %s314
          %s319 = smul.addr %s318, 128
          %s320 = scalar_lea.hbm %s2, %s319
          %s321 = sshll.u32 %s310, 4
          %s322 = int_to_ptr.vmem [resolvable:$true] %s321
          %327 = dma.vmem_to_hbm [thread:$0]  %s322, 256, %s320, %s307, 128, 128, 8
        $region36: #{esm_embed_forward.1} parent=27 // pred_fallthru
          _
      $region28: #{esm_embed_forward.1} parent=5 // pred_fallthru
        _
      %p328 = scmp.le.s32.totalorder 2, %s12
      // Predicated region
      $region37: #{esm_embed_forward.1} parent=5 // pred_check
        %p329 = pneg %p328
      $region38: #{esm_embed_forward.1} parent=5 // pred_check_branch
        %331 = sbr.rel (%p329) target = $region40
      $region39: #{esm_embed_forward.1} parent=5 // pred_region
        %s332 = ssub.s32 %s12, 2
        // Predicated region
        $region41: #{esm_embed_forward.1} parent=39 // pred_check
          %p333 = pneg %p107
        $region42: #{esm_embed_forward.1} parent=39 // pred_check_branch
          %335 = sbr.rel (%p333) target = $region44
        $region43: #{esm_embed_forward.1} parent=39 // pred_region
          %s336 = sand.u32 %s92, 1
          %s337 = scalar_lea.sflag [#allocation4], %s336
          %s338 = sand.u32 %s92, 1
          %s339 = smul.addr %s338, 16
          %s340 = scalar_lea.vmem [#allocation5], %s339
          %341 = dma.done %s337, 256
        $region44: #{esm_embed_forward.1} parent=39 // pred_fallthru
          _
      $region40: #{esm_embed_forward.1} parent=5 // pred_fallthru
        _
    $region6: #{esm_embed_forward.1} parent=1 // loop_footer
      %s16 = sadd.s32 1, %s12
    $region7: #{esm_embed_forward.1} parent=1 // loop_footer_branch
      %11 = sbr.rel target = $region3
    $region8: #{esm_embed_forward.1} parent=1 // loop_exit
      _
    %342 = vsyncpa [#allocation3], 1
    %s343 = scalar_lea.sflag [#allocation3], 1
    %344 = vsyncpa %s343, 1
    %345 = vsyncpa [#allocation4], 1
    %s346 = scalar_lea.sflag [#allocation4], 1
    %347 = vsyncpa %s346, 1

</llo_original>
